<compile_context>
chip_gen: v6e
topology: v6e:2x2x1
jax: 0.10.0
libtpu: 0.0.40
codegen_flags: <defaults>
</compile_context>

<pallas_src>
import functools

import jax
import jax.numpy as jnp
from jax.experimental import pallas as pl
from jax.experimental.pallas import tpu as pltpu


def _round_up(v, m):
    return (v + m - 1) // m * m


def _patch_embed_kernel(x_ref, w_ref, b_ref, o_ref):
    # x_ref: (tm, K)  patch rows (K = C*ph*pw, full axis -> contiguous DMA)
    # w_ref: (K,  E)  resident projection weight
    # b_ref: (1,  E)  bias
    # o_ref: (tm, E)
    y = jnp.dot(x_ref[...], w_ref[...], preferred_element_type=jnp.float32)
    y = y + b_ref[...].astype(jnp.float32)
    o_ref[...] = y.astype(o_ref.dtype)


@functools.partial(jax.jit, static_argnames=("patch_size", "tm", "use_bf16"))
def patch_embed_pallas(x, w_conv, b, *, patch_size=(4, 4), tm=1024, use_bf16=False):
    """PatchEmbed forward.

    x:      (B, C, H, W)
    w_conv: (E, C, ph, pw)   -- PyTorch Conv2d weight layout
    b:      (E,)
    returns (B, Ho*Wo, E)
    """
    B, C, H, W = x.shape
    ph, pw = patch_size
    assert H % ph == 0 and W % pw == 0, "image size must match patch grid"
    Ho, Wo = H // ph, W // pw
    E = w_conv.shape[0]
    M = B * Ho * Wo
    K = C * ph * pw

    # --- im2col: (B,C,H,W) -> (M, K), K ordered (c, i, j) to match the Conv2d
    #     weight flattening. One fused transpose copy in XLA; no padding.
    patches = x.reshape(B, C, Ho, ph, Wo, pw)
    patches = patches.transpose(0, 2, 4, 1, 3, 5).reshape(M, K)

    # --- Conv2d weight as a (K, E) matmul operand; bias as (1, E).
    w2d = w_conv.reshape(E, K).T
    b2d = b.reshape(1, E)

    if use_bf16:
        # Halves the dominant HBM input stream; f32 accumulation kept in-kernel.
        patches = patches.astype(jnp.bfloat16)
        w2d = w2d.astype(jnp.bfloat16)

    # Row tile: multiple of 8, shrunk for tiny inputs; grid handles ragged M.
    tm_eff = min(tm, _round_up(M, 8))
    grid = (pl.cdiv(M, tm_eff),)

    in_bytes = (patches.size * patches.dtype.itemsize
                + w2d.size * w2d.dtype.itemsize
                + b2d.size * b2d.dtype.itemsize)
    out_bytes = M * E * x.dtype.itemsize
    cost = pl.CostEstimate(flops=2 * M * K * E,
                           transcendentals=0,
                           bytes_accessed=in_bytes + out_bytes)

    out = pl.pallas_call(
        _patch_embed_kernel,
        out_shape=jax.ShapeDtypeStruct((M, E), x.dtype),
        grid_spec=pltpu.PrefetchScalarGridSpec(
            num_scalar_prefetch=0,
            grid=grid,
            in_specs=[
                pl.BlockSpec((tm_eff, K), lambda i: (i, 0)),  # patch rows
                pl.BlockSpec((K, E), lambda i: (0, 0)),        # weight (resident)
                pl.BlockSpec((1, E), lambda i: (0, 0)),        # bias   (resident)
            ],
            out_specs=pl.BlockSpec((tm_eff, E), lambda i: (i, 0)),
        ),
        compiler_params=pltpu.CompilerParams(
            dimension_semantics=("parallel",),
            vmem_limit_bytes=32 * 1024 * 1024,
        ),
        cost_estimate=cost,
    )(patches, w2d, b2d)

    # TODO(synk): optional norm_layer (LayerNorm over embed_dim) is None in the
    # default PatchEmbed config, so no normalization is fused here.

    return out.reshape(B, Ho * Wo, E)


def patch_embed_reference(x, w_conv, b, patch_size=(4, 4)):
    """Pure-JAX reference matching PyTorch: Conv2d(stride=patch) + flatten."""
    y = jax.lax.conv_general_dilated(
        x, w_conv, window_strides=patch_size, padding="VALID",
        dimension_numbers=("NCHW", "OIHW", "NCHW"))
    y = y + b[None, :, None, None]
    B, E, Ho, Wo = y.shape
    return y.reshape(B, E, Ho * Wo).transpose(0, 2, 1)


if __name__ == "__main__":
    # Small, deterministic config consistent with the module defaults
    # (in_chans=3, patch_size=4, embed_dim=96) at a reduced image size.
    key = jax.random.PRNGKey(0)
    kx, kw, kb, kx2 = jax.random.split(key, 4)

    B, C, H, W = 2, 3, 16, 16
    patch = (4, 4)
    embed_dim = 96

    x = jax.random.normal(kx, (B, C, H, W), dtype=jnp.float32)
    w_conv = jax.random.normal(kw, (embed_dim, C, patch[0], patch[1]),
                               jnp.float32) * 0.02
    b = jax.random.normal(kb, (embed_dim,), jnp.float32) * 0.02

    out = jax.block_until_ready(patch_embed_pallas(x, w_conv, b, patch_size=patch))
    ref = patch_embed_reference(x, w_conv, b, patch)
    Ho, Wo = H // patch[0], W // patch[1]
    assert out.shape == (B, Ho * Wo, embed_dim)
    assert jnp.allclose(out, ref, atol=5e-4, rtol=5e-4), "mismatch vs reference"

    # Ragged-M path: M not a multiple of the row tile, no host-side M pad.
    H2 = W2 = 20
    x2 = jax.random.normal(kx2, (B, C, H2, W2), dtype=jnp.float32)
    out2 = jax.block_until_ready(patch_embed_pallas(x2, w_conv, b, patch_size=patch))
    ref2 = patch_embed_reference(x2, w_conv, b, patch)
    assert out2.shape == (B, (H2 // patch[0]) * (W2 // patch[1]), embed_dim)
    assert jnp.allclose(out2, ref2, atol=5e-4, rtol=5e-4), "mismatch (ragged M)"

    print("KERNEL_OK")
</pallas_src>

<mosaic_0001>
module attributes {stable_mosaic.version = 11 : i64} {
  func.func @_patch_embed_kernel(%arg0: i32, %arg1: memref<32x48xf32, #tpu.memory_space<vmem>>, %arg2: memref<48x96xf32, #tpu.memory_space<vmem>>, %arg3: memref<1x96xf32, #tpu.memory_space<vmem>>, %arg4: memref<32x96xf32, #tpu.memory_space<vmem>>) attributes {dimension_semantics = [#tpu.dimension_semantics<parallel>], iteration_bounds = array<i64: 1>, scalar_prefetch = 0 : i64, scratch_operands = 0 : i64, tpu.core_type = #tpu.core_type<tc>, window_params = [{transform_indices = @transform_0, window_bounds = array<i64: 32, 48>}, {pipeline_mode = #tpu.pipeline_mode<synchronous>, transform_indices = @transform_1, window_bounds = array<i64: 48, 96>}, {pipeline_mode = #tpu.pipeline_mode<synchronous>, transform_indices = @transform_2, window_bounds = array<i64: 1, 96>}, {transform_indices = @transform_3, window_bounds = array<i64: 32, 96>}]} {
    %c0 = arith.constant 0 : index
    %c0_0 = arith.constant 0 : index
    %0 = vector.load %arg1[%c0, %c0_0] : memref<32x48xf32, #tpu.memory_space<vmem>>, vector<32x48xf32>
    %c0_1 = arith.constant 0 : index
    %c0_2 = arith.constant 0 : index
    %1 = vector.load %arg2[%c0_1, %c0_2] : memref<48x96xf32, #tpu.memory_space<vmem>>, vector<48x96xf32>
    %cst = arith.constant dense<0.000000e+00> : vector<32x96xf32>
    %2 = tpu.matmul %0, %1, %cst {dimension_numbers = #tpu.dot_dimension_numbers<[1], [0], [0], [1], [0, 0, 1, 1], [], []>} : vector<32x48xf32>, vector<48x96xf32>, vector<32x96xf32> -> vector<32x96xf32>
    %c0_3 = arith.constant 0 : index
    %c0_4 = arith.constant 0 : index
    %3 = vector.load %arg3[%c0_3, %c0_4] : memref<1x96xf32, #tpu.memory_space<vmem>>, vector<1x96xf32>
    %4 = vector.broadcast %3 : vector<1x96xf32> to vector<32x96xf32>
    %5 = arith.addf %2, %4 : vector<32x96xf32>
    %c0_5 = arith.constant 0 : index
    %c0_6 = arith.constant 0 : index
    %6 = vector.load %arg4[%c0_5, %c0_6] : memref<32x96xf32, #tpu.memory_space<vmem>>, vector<32x96xf32>
    tpu.vector_store %arg4[%c0_5, %c0_6], %5 {strides = array<i32>} : memref<32x96xf32, #tpu.memory_space<vmem>>, vector<32x96xf32>,
    return
  }
  func.func @transform_0(%arg0: i32) -> (i32, i32) {
    %c0_i32 = arith.constant 0 : i32
    %c0_i32_0 = arith.constant 0 : i32
    return %arg0, %c0_i32 : i32, i32
  }
  func.func @transform_1(%arg0: i32) -> (i32, i32) {
    %c0_i32 = arith.constant 0 : i32
    %c0_i32_0 = arith.constant 0 : i32
    %c0_i32_1 = arith.constant 0 : i32
    return %c0_i32, %c0_i32_0 : i32, i32
  }
  func.func @transform_2(%arg0: i32) -> (i32, i32) {
    %c0_i32 = arith.constant 0 : i32
    %c0_i32_0 = arith.constant 0 : i32
    %c0_i32_1 = arith.constant 0 : i32
    return %c0_i32, %c0_i32_0 : i32, i32
  }
  func.func @transform_3(%arg0: i32) -> (i32, i32) {
    %c0_i32 = arith.constant 0 : i32
    %c0_i32_0 = arith.constant 0 : i32
    return %arg0, %c0_i32 : i32, i32
  }
}

</mosaic_0001>

<llo_original>
// kernel: patch_embed_pallas.1
$region0: #{patch_embed_pallas.1}
  #allocation0 [shape = 'u32[]', space=smem, size = 0x4, offset = 0x4, fixed_abs, tag = 'smem constant byte address 0x4 - core index']
  #allocation1 [shape = 'u32[144,128]{1,0:T(1,128)}', space=vmem, size = 0x12000, scoped, tag = 'internal scratch']
  %s0 = inlined_call_operand.vmem [shape: f32[32,48], index: 0, kind: input, shape index: {}]
  %s1 = inlined_call_operand.vmem [shape: f32[48,96], index: 1, kind: input, shape index: {}]
  %s2 = inlined_call_operand.vmem [shape: f32[1,96], index: 2, kind: input, shape index: {}]
  %s3 = inlined_call_operand.hbm [shape: f32[32,96], index: 3, kind: output, shape index: {}]
  %s4 = sld [smem:[#allocation0]]
  $region22: #{patch_embed_pallas.1} parent=0
    _
  %s6 = ssub.s32 1, %s4
  %s7 = scalar_select 0, %s6, %s4
  $region1: #{patch_embed_pallas.1} parent=0
    #allocation2 [shape = 'u8[16384]{0}', space=vmem, size = 0x4000, scoped, tag = 'output window, operand 0, single buffered']
    #allocation3 [shape = 's32[1]{0}', space=sflag, size = 0x4, scoped, tag = 'scoped memory for patch_embed_pallas.1']
    %8 = vsyncpa [#allocation3], 0
    // Predicated region
    $region2: #{patch_embed_pallas.1} parent=1 // pred_check
      _
    $region3: #{patch_embed_pallas.1} parent=1 // pred_check_branch
      %10 = sbr.rel (0) target = $region5
    $region4: #{patch_embed_pallas.1} parent=1 // pred_region
      _
    $region5: #{patch_embed_pallas.1} parent=1 // pred_fallthru
      _
    // Predicated region
    $region6: #{patch_embed_pallas.1} parent=1 // pred_check
      _
    $region7: #{patch_embed_pallas.1} parent=1 // pred_check_branch
      %12 = sbr.rel (0) target = $region9
    $region8: #{patch_embed_pallas.1} parent=1 // pred_region
      _
    $region9: #{patch_embed_pallas.1} parent=1 // pred_fallthru
      _
    // Predicated region
    $region10: #{patch_embed_pallas.1} parent=1 // pred_check
      _
    $region11: #{patch_embed_pallas.1} parent=1 // pred_check_branch
      %14 = sbr.rel (0) target = $region13
    $region12: #{patch_embed_pallas.1} parent=1 // pred_region
      _
    $region13: #{patch_embed_pallas.1} parent=1 // pred_fallthru
      _
    %v15 = vld [vmem:[%s0] sm:$0xff]
    %v16 = vld [vmem:[%s0 + $0x8] sm:$0xff]
    %v17 = vld [vmem:[%s0 + $0x10] sm:$0xff]
    %v18 = vld [vmem:[%s0 + $0x18] sm:$0xff]
    %v19 = vld [vmem:[%s1] sm:$0xff]
    %v20 = vld [vmem:[%s1 + $0x8] sm:$0xff]
    %v21 = vld [vmem:[%s1 + $0x10] sm:$0xff]
    %v22 = vld [vmem:[%s1 + $0x18] sm:$0xff]
    %v23 = vld [vmem:[%s1 + $0x20] sm:$0xff]
    %v24 = vld [vmem:[%s1 + $0x28] sm:$0xff]
    %v25 = vld [vmem:[%s2] sm:$0x1]
    %v27 = vlaneseq
    %v28 = vshrl.u32 %v27, 7
    %v29 = vsub.s32 0, %v28
    %v30 = vrot.slane %v25, %v29
    %vm32 = vcmask 392192
    %v34 = vsel %vm32, %v15, 0
    %v37 = vsel %vm32, %v16, 0
    %v40 = vsel %vm32, %v17, 0
    %v43 = vsel %vm32, %v18, 0
    %45 = vmatprep.subr.mxu0 0.0
    %46 = vmatpush1.msra.mxu0 0.0
    %47 = vmatprep.subr.mxu0 0.0
    %48 = vmatpush1.msra.mxu0 0.0
    %49 = vmatprep.subr.mxu0 0.0
    %50 = vmatpush1.msra.mxu0 0.0
    %51 = vmatprep.subr.mxu0 0.0
    %52 = vmatpush1.msra.mxu0 0.0
    %53 = vmatprep.subr.mxu0 0.0
    %54 = vmatpush1.msra.mxu0 0.0
    %55 = vmatprep.subr.mxu0 0.0
    %56 = vmatpush1.msra.mxu0 0.0
    %57 = vmatprep.subr.mxu0 0.0
    %58 = vmatpush1.msra.mxu0 0.0
    %59 = vmatprep.subr.mxu0 0.0
    %60 = vmatpush1.msra.mxu0 0.0
    %61 = vmatprep.subr.mxu0 0.0
    %62 = vmatpush1.msra.mxu0 0.0
    %63 = vmatprep.subr.mxu0 0.0
    %64 = vmatpush1.msra.mxu0 0.0
    %65 = vmatprep.subr.mxu0 0.0
    %66 = vmatpush1.msra.mxu0 %v24
    %67 = vmatprep.subr.mxu0 0.0
    %68 = vmatpush1.msra.mxu0 %v23
    %69 = vmatprep.subr.mxu0 0.0
    %70 = vmatpush1.msra.mxu0 %v22
    %71 = vmatprep.subr.mxu0 0.0
    %72 = vmatpush1.msra.mxu0 %v21
    %73 = vmatprep.subr.mxu0 0.0
    %74 = vmatpush1.msra.mxu0 %v20
    %75 = vmatprep.subr.mxu0 0.0
    %76 = vmatpush1.msra.mxu0 %v19
    %77 = vmatprep.subr.mxu0 0.0
    %78 = vmatpush2.msra.mxu0 0.0
    %79 = vmatprep.subr.mxu0 0.0
    %80 = vmatpush2.msra.mxu0 0.0
    %81 = vmatprep.subr.mxu0 0.0
    %82 = vmatpush2.msra.mxu0 0.0
    %83 = vmatprep.subr.mxu0 0.0
    %84 = vmatpush2.msra.mxu0 0.0
    %85 = vmatprep.subr.mxu0 0.0
    %86 = vmatpush2.msra.mxu0 0.0
    %87 = vmatprep.subr.mxu0 0.0
    %88 = vmatpush2.msra.mxu0 0.0
    %89 = vmatprep.subr.mxu0 0.0
    %90 = vmatpush2.msra.mxu0 0.0
    %91 = vmatprep.subr.mxu0 0.0
    %92 = vmatpush2.msra.mxu0 0.0
    %93 = vmatprep.subr.mxu0 0.0
    %94 = vmatpush2.msra.mxu0 0.0
    %95 = vmatprep.subr.mxu0 0.0
    %96 = vmatpush2.msra.mxu0 0.0
    %97 = vmatprep.subr.mxu0 0.0
    %98 = vmatpush2.msra.mxu0 0.0
    %99 = vmatprep.subr.mxu0 0.0
    %100 = vmatpush2.msra.mxu0 0.0
    %101 = vmatprep.subr.mxu0 0.0
    %102 = vmatpush2.msra.mxu0 0.0
    %103 = vmatprep.subr.mxu0 0.0
    %104 = vmatpush2.msra.mxu0 0.0
    %105 = vmatprep.subr.mxu0 0.0
    %106 = vmatpush2.msra.mxu0 0.0
    %107 = vmatprep.subr.mxu0 0.0
    %108 = vmatpush2.msra.mxu0 0.0
    %109 = vmatprep.mubr.f32.mxu0 0.0
    %110 = vmatmul.mubr.f32.gmra.mxu0 %v34
    %v111 = vpop.f32.mrf.mxu0
    %v112 = vadd.f32 %v30, %v111
    %v113 = vpop.f32.mrf.mxu0
    %114 = vmatprep.mubr.f32.mxu0 0.0
    %115 = vmatmul.mubr.f32.gmra.mxu0 %v37
    %v116 = vpop.f32.mrf.mxu0
    %v117 = vadd.f32 %v30, %v116
    %v118 = vpop.f32.mrf.mxu0
    %119 = vmatprep.mubr.f32.mxu0 0.0
    %120 = vmatmul.mubr.f32.gmra.mxu0 %v40
    %v121 = vpop.f32.mrf.mxu0
    %v122 = vadd.f32 %v30, %v121
    %v123 = vpop.f32.mrf.mxu0
    %124 = vmatprep.mubr.f32.mxu0 0.0
    %125 = vmatmul.mubr.f32.gmra.mxu0 %v43
    %v126 = vpop.f32.mrf.mxu0
    %v127 = vadd.f32 %v30, %v126
    %v128 = vpop.f32.mrf.mxu0
    %129 = vdwg.mxu0
    %vm130 = vcmask 785408
    %131 = vst.msk [vmem:[#allocation2] sm:$0xff] %vm130, %v112
    %132 = vst.msk [vmem:[#allocation2 + $0x8] sm:$0xff] %vm130, %v117
    %133 = vst.msk [vmem:[#allocation2 + $0x10] sm:$0xff] %vm130, %v122
    %134 = vst.msk [vmem:[#allocation2 + $0x18] sm:$0xff] %vm130, %v127
    // Predicated region
    $region14: #{patch_embed_pallas.1} parent=1 // pred_check
      _
    $region15: #{patch_embed_pallas.1} parent=1 // pred_check_branch
      %136 = sbr.rel (0) target = $region17
    $region16: #{patch_embed_pallas.1} parent=1 // pred_region
      %s138 = ssub.s32 512, 512
      %139 = vsyncadd [#allocation3], %s138
      %s140 = sshll.u32 [#allocation2], 4
      %s141 = int_to_ptr.vmem [resolvable:$true] %s140
      %146 = dma.vmem_to_hbm [thread:$0]  %s141, 512, %s3, [#allocation3], 128, 128, 8
    $region17: #{patch_embed_pallas.1} parent=1 // pred_fallthru
      _
    // Predicated region
    $region18: #{patch_embed_pallas.1} parent=1 // pred_check
      _
    $region19: #{patch_embed_pallas.1} parent=1 // pred_check_branch
      %148 = sbr.rel (0) target = $region21
    $region20: #{patch_embed_pallas.1} parent=1 // pred_region
      %149 = dma.done [#allocation3], 512
    $region21: #{patch_embed_pallas.1} parent=1 // pred_fallthru
      _
    %150 = vsyncpa [#allocation3], 1

</llo_original>
